<compile_context>
chip_gen: v7x
topology: tpu7x:2x2x1
jax: 0.10.0
libtpu: 0.0.40
codegen_flags: <defaults>
</compile_context>

<pallas_src>
import jax
import jax.numpy as jnp
from jax.experimental import pallas as pl
from jax.experimental.pallas import tpu as pltpu

BN_EPS = 1e-5


def gan_kernel(x_ref, wt_ref, p_ref, o_ref):
    # Linear (no bias; bias is cancelled exactly by the BN mean subtraction):
    # (N, D) x (D, TO) -> (N, TO), f32 accumulation on the MXU.
    y = jax.lax.dot_general(
        x_ref[...], wt_ref[...],
        dimension_numbers=(((1,), (0,)), ((), ())),
        preferred_element_type=jnp.float32,
    )

    # BatchNorm1d, training mode: per-feature batch mean / biased variance.
    # Single pass: sum and sum-of-squares (two XLU sublane reductions).
    inv_n = 1.0 / y.shape[0]
    s = jnp.sum(y, axis=0, keepdims=True)            # (1, TO)
    s2 = jnp.sum(y * y, axis=0, keepdims=True)       # (1, TO)
    mean = s * inv_n
    var = jnp.maximum(s2 * inv_n - mean * mean, 0.0)  # clamp fp rounding
    inv_std = jax.lax.rsqrt(var + BN_EPS)             # EUP slot

    # Fold affine + normalization into one FMA per element.
    gamma = p_ref[0:1, :]
    beta = p_ref[1:2, :]
    scale = gamma * inv_std                           # (1, TO)
    shift = beta - mean * scale                       # (1, TO)
    o_ref[...] = (y * scale + shift).astype(o_ref.dtype)


def gan_forward(x, w, b=None, gamma=None, beta=None, *, to=None,
                compute_dtype=None):
    """x: (N, D); w: (O, D); b, gamma, beta: (O,). Returns (N, O) f32.

    b is accepted for nn.Linear API parity but unused: with training-mode
    BatchNorm the bias cancels exactly in (y + b) - mean(y + b).
    """
    del b  # cancelled by BN mean subtraction
    N, D = x.shape
    O = w.shape[0]

    # One-time relayout to (D, O): lane-dense weight tiles, no per-tile
    # transpose inside the kernel.
    wt = w.T
    if compute_dtype is not None:
        x = x.astype(compute_dtype)
        wt = wt.astype(compute_dtype)

    # Pack per-feature params into a single (2, O) array -> one DMA per step.
    params = jnp.stack([gamma, beta]).astype(jnp.float32)  # (2, O)

    # Feature-axis tile: single full-width block for small / non-128-multiple
    # O (block dim == full array dim, so no padding or output slice needed);
    # otherwise tile at 128/256/512 so stores stay large unmasked vst runs.
    if to is None:
        if O % 128 == 0 and O > 128:
            to = 512 if O % 512 == 0 else (256 if O % 256 == 0 else 128)
            to = min(to, O)
        else:
            to = O
    assert O % to == 0, "feature tile must divide O"
    grid = (O // to,)

    # VMEM budget from the actual tile footprint (double-buffered inputs and
    # outputs). Only raise the limit when it exceeds the smallest scoped
    # default (16 MiB, v5e); cap at 48 MiB to keep v7x headroom.
    x_bytes = N * D * x.dtype.itemsize
    w_tile_bytes = D * to * wt.dtype.itemsize
    out_tile_bytes = N * to * 4
    p_tile_bytes = 2 * to * 4
    need = 2 * (x_bytes + w_tile_bytes + out_tile_bytes + p_tile_bytes) + (1 << 20)
    cp_kwargs = dict(dimension_semantics=("parallel",))
    if need > (16 << 20):
        cp_kwargs["vmem_limit_bytes"] = min(need, 48 << 20)

    out = pl.pallas_call(
        gan_kernel,
        out_shape=jax.ShapeDtypeStruct((N, O), jnp.float32),
        grid=grid,
        in_specs=[
            # Full x block, reused for every feature tile.
            pl.BlockSpec((N, D), lambda j: (0, 0)),
            # Lane-dense weight tile: full D x TO output features.
            pl.BlockSpec((D, to), lambda j: (0, j)),
            # Packed gamma/beta tile.
            pl.BlockSpec((2, to), lambda j: (0, j)),
        ],
        out_specs=pl.BlockSpec((N, to), lambda j: (0, j)),
        compiler_params=pltpu.CompilerParams(**cp_kwargs),
    )(x, wt, params)

    return out


if __name__ == "__main__":
    # config.hidden_size_mlp[-1] = 32 (input features), config.output_size = 16
    N, D, O = 8, 32, 16

    key = jax.random.PRNGKey(0)
    kx, kw, kb = jax.random.split(key, 3)

    x = jax.random.normal(kx, (N, D), dtype=jnp.float32)

    # Deterministic parameter init (nn.Linear-style uniform bound, BN affine = 1/0)
    bound = 1.0 / (D ** 0.5)
    w = jax.random.uniform(kw, (O, D), minval=-bound, maxval=bound, dtype=jnp.float32)
    b = jax.random.uniform(kb, (O,), minval=-bound, maxval=bound, dtype=jnp.float32)
    gamma = jnp.ones((O,), dtype=jnp.float32)
    beta = jnp.zeros((O,), dtype=jnp.float32)

    out = gan_forward(x, w, b, gamma, beta)
    jax.block_until_ready(out)

    # Pure-JAX reference (training-mode BatchNorm1d semantics, biased variance).
    # Bias is included here; it cancels mathematically in the normalized output.
    y_ref = x @ w.T + b
    mean = y_ref.mean(axis=0, keepdims=True)
    var = ((y_ref - mean) ** 2).mean(axis=0, keepdims=True)
    ref = (y_ref - mean) / jnp.sqrt(var + BN_EPS) * gamma + beta

    assert out.shape == (N, O)
    assert jnp.allclose(out, ref, atol=1e-4, rtol=1e-4)

    print("KERNEL_OK")
</pallas_src>

<mosaic_0001>
module attributes {stable_mosaic.version = 11 : i64} {
  func.func @gan_kernel(%arg0: i32, %arg1: memref<8x32xf32, #tpu.memory_space<vmem>>, %arg2: memref<32x16xf32, #tpu.memory_space<vmem>>, %arg3: memref<2x16xf32, #tpu.memory_space<vmem>>, %arg4: memref<8x16xf32, #tpu.memory_space<vmem>>) attributes {dimension_semantics = [#tpu.dimension_semantics<parallel>], iteration_bounds = array<i64: 1>, scalar_prefetch = 0 : i64, scratch_operands = 0 : i64, tpu.core_type = #tpu.core_type<tc>, window_params = [{pipeline_mode = #tpu.pipeline_mode<synchronous>, transform_indices = @transform_0, window_bounds = array<i64: 8, 32>}, {transform_indices = @transform_1, window_bounds = array<i64: 32, 16>}, {transform_indices = @transform_2, window_bounds = array<i64: 2, 16>}, {transform_indices = @transform_3, window_bounds = array<i64: 8, 16>}]} {
    %c0 = arith.constant 0 : index
    %c0_0 = arith.constant 0 : index
    %0 = vector.load %arg1[%c0, %c0_0] : memref<8x32xf32, #tpu.memory_space<vmem>>, vector<8x32xf32>
    %c0_1 = arith.constant 0 : index
    %c0_2 = arith.constant 0 : index
    %1 = vector.load %arg2[%c0_1, %c0_2] : memref<32x16xf32, #tpu.memory_space<vmem>>, vector<32x16xf32>
    %cst = arith.constant dense<0.000000e+00> : vector<8x16xf32>
    %2 = tpu.matmul %0, %1, %cst {dimension_numbers = #tpu.dot_dimension_numbers<[1], [0], [0], [1], [0, 0, 1, 1], [], []>} : vector<8x32xf32>, vector<32x16xf32>, vector<8x16xf32> -> vector<8x16xf32>
    %cst_3 = arith.constant dense<0.000000e+00> : vector<16xf32>
    %3 = vector.multi_reduction <add>, %2, %cst_3 [0] : vector<8x16xf32> to vector<16xf32>
    %4 = vector.shape_cast %3 : vector<16xf32> to vector<1x16xf32>
    %5 = arith.mulf %2, %2 : vector<8x16xf32>
    %cst_4 = arith.constant dense<0.000000e+00> : vector<16xf32>
    %6 = vector.multi_reduction <add>, %5, %cst_4 [0] : vector<8x16xf32> to vector<16xf32>
    %7 = vector.shape_cast %6 : vector<16xf32> to vector<1x16xf32>
    %cst_5 = arith.constant 1.250000e-01 : f32
    %8 = vector.broadcast %cst_5 : f32 to vector<1x16xf32>
    %9 = arith.mulf %4, %8 : vector<1x16xf32>
    %cst_6 = arith.constant 1.250000e-01 : f32
    %10 = vector.broadcast %cst_6 : f32 to vector<1x16xf32>
    %11 = arith.mulf %7, %10 : vector<1x16xf32>
    %12 = arith.mulf %9, %9 : vector<1x16xf32>
    %13 = arith.subf %11, %12 : vector<1x16xf32>
    %cst_7 = arith.constant 0.000000e+00 : f32
    %14 = vector.broadcast %cst_7 : f32 to vector<1x16xf32>
    %15 = arith.maximumf %13, %14 : vector<1x16xf32>
    %cst_8 = arith.constant 9.99999974E-6 : f32
    %16 = vector.broadcast %cst_8 : f32 to vector<1x16xf32>
    %17 = arith.addf %15, %16 : vector<1x16xf32>
    %18 = math.rsqrt %17 : vector<1x16xf32>
    %c0_9 = arith.constant 0 : index
    %c0_10 = arith.constant 0 : index
    %19 = vector.load %arg3[%c0_9, %c0_10] : memref<2x16xf32, #tpu.memory_space<vmem>>, vector<1x16xf32>
    %c1 = arith.constant 1 : index
    %c0_11 = arith.constant 0 : index
    %20 = vector.load %arg3[%c1, %c0_11] : memref<2x16xf32, #tpu.memory_space<vmem>>, vector<1x16xf32>
    %21 = arith.mulf %19, %18 : vector<1x16xf32>
    %22 = arith.mulf %9, %21 : vector<1x16xf32>
    %23 = arith.subf %20, %22 : vector<1x16xf32>
    %24 = vector.broadcast %21 : vector<1x16xf32> to vector<8x16xf32>
    %25 = arith.mulf %2, %24 : vector<8x16xf32>
    %26 = vector.broadcast %23 : vector<1x16xf32> to vector<8x16xf32>
    %27 = arith.addf %25, %26 : vector<8x16xf32>
    %c0_12 = arith.constant 0 : index
    %c0_13 = arith.constant 0 : index
    %28 = vector.load %arg4[%c0_12, %c0_13] : memref<8x16xf32, #tpu.memory_space<vmem>>, vector<8x16xf32>
    tpu.vector_store %arg4[%c0_12, %c0_13], %27 {strides = array<i32>} : memref<8x16xf32, #tpu.memory_space<vmem>>, vector<8x16xf32>,
    return
  }
  func.func @transform_0(%arg0: i32) -> (i32, i32) {
    %c0_i32 = arith.constant 0 : i32
    %c0_i32_0 = arith.constant 0 : i32
    %c0_i32_1 = arith.constant 0 : i32
    return %c0_i32, %c0_i32_0 : i32, i32
  }
  func.func @transform_1(%arg0: i32) -> (i32, i32) {
    %c0_i32 = arith.constant 0 : i32
    %c0_i32_0 = arith.constant 0 : i32
    return %c0_i32, %arg0 : i32, i32
  }
  func.func @transform_2(%arg0: i32) -> (i32, i32) {
    %c0_i32 = arith.constant 0 : i32
    %c0_i32_0 = arith.constant 0 : i32
    return %c0_i32, %arg0 : i32, i32
  }
  func.func @transform_3(%arg0: i32) -> (i32, i32) {
    %c0_i32 = arith.constant 0 : i32
    %c0_i32_0 = arith.constant 0 : i32
    return %c0_i32, %arg0 : i32, i32
  }
}

</mosaic_0001>

<llo_original>
// kernel: tpu_custom_call.1
$region0: #{tpu_custom_call.1}
  #allocation0 [shape = 'u32[]', space=smem, size = 0x4, offset = 0x4, fixed_abs, tag = 'smem constant byte address 0x4 - core index']
  #allocation1 [shape = 'u32[144,128]{1,0:T(1,128)}', space=vmem, size = 0x12000, scoped, tag = 'internal scratch']
  %s0 = inlined_call_operand.vmem [shape: f32[8,32], index: 0, kind: input, shape index: {}]
  %s1 = inlined_call_operand.vmem [shape: f32[32,16], index: 1, kind: input, shape index: {}]
  %s2 = inlined_call_operand.vmem [shape: f32[2,16], index: 2, kind: input, shape index: {}]
  %s3 = inlined_call_operand.hbm [shape: f32[8,16], index: 3, kind: output, shape index: {}]
  %s4 = sld [smem:[#allocation0]]
  $region22: #{tpu_custom_call.1} parent=0
    _
  %s6 = ssub.s32 1, %s4
  %s7 = scalar_select 0, %s6, %s4
  $region1: #{tpu_custom_call.1} parent=0
    #allocation2 [shape = 'u8[4096]{0}', space=vmem, size = 0x1000, scoped, tag = 'output window, operand 0, single buffered']
    #allocation3 [shape = 's32[1]{0}', space=sflag, size = 0x4, scoped, tag = 'scoped memory for tpu_custom_call.1']
    %8 = vsyncpa [#allocation3], 0
    // Predicated region
    $region2: #{tpu_custom_call.1} parent=1 // pred_check
      _
    $region3: #{tpu_custom_call.1} parent=1 // pred_check_branch
      %10 = sbr.rel (0) target = $region5
    $region4: #{tpu_custom_call.1} parent=1 // pred_region
      _
    $region5: #{tpu_custom_call.1} parent=1 // pred_fallthru
      _
    // Predicated region
    $region6: #{tpu_custom_call.1} parent=1 // pred_check
      _
    $region7: #{tpu_custom_call.1} parent=1 // pred_check_branch
      %12 = sbr.rel (0) target = $region9
    $region8: #{tpu_custom_call.1} parent=1 // pred_region
      _
    $region9: #{tpu_custom_call.1} parent=1 // pred_fallthru
      _
    // Predicated region
    $region10: #{tpu_custom_call.1} parent=1 // pred_check
      _
    $region11: #{tpu_custom_call.1} parent=1 // pred_check_branch
      %14 = sbr.rel (0) target = $region13
    $region12: #{tpu_custom_call.1} parent=1 // pred_region
      _
    $region13: #{tpu_custom_call.1} parent=1 // pred_fallthru
      _
    %v15 = vld [vmem:[%s0] sm:$0xff]
    %v16 = vld [vmem:[%s1] sm:$0xff]
    %v17 = vld [vmem:[%s1 + $0x8] sm:$0xff]
    %v18 = vld [vmem:[%s1 + $0x10] sm:$0xff]
    %v19 = vld [vmem:[%s1 + $0x18] sm:$0xff]
    %vm20 = vcmask 261120
    %v22 = vsel %vm20, %v15, 0
    %24 = vmatprep.subr.mxu0 0.0
    %25 = vmatpush1.msra.mxu0 %v16
    %26 = vmatprep.subr.mxu0 0.0
    %27 = vmatpush1.msra.mxu0 %v17
    %28 = vmatprep.subr.mxu0 0.0
    %29 = vmatpush1.msra.mxu0 %v18
    %30 = vmatprep.subr.mxu0 0.0
    %31 = vmatpush1.msra.mxu0 %v19
    %32 = vmatprep.subr.mxu0 0.0
    %33 = vmatpush1.msra.mxu0 0.0
    %34 = vmatprep.subr.mxu0 0.0
    %35 = vmatpush1.msra.mxu0 0.0
    %36 = vmatprep.subr.mxu0 0.0
    %37 = vmatpush1.msra.mxu0 0.0
    %38 = vmatprep.subr.mxu0 0.0
    %39 = vmatpush1.msra.mxu0 0.0
    %40 = vmatprep.subr.mxu0 0.0
    %41 = vmatpush1.msra.mxu0 0.0
    %42 = vmatprep.subr.mxu0 0.0
    %43 = vmatpush1.msra.mxu0 0.0
    %44 = vmatprep.subr.mxu0 0.0
    %45 = vmatpush1.msra.mxu0 0.0
    %46 = vmatprep.subr.mxu0 0.0
    %47 = vmatpush1.msra.mxu0 0.0
    %48 = vmatprep.subr.mxu0 0.0
    %49 = vmatpush1.msra.mxu0 0.0
    %50 = vmatprep.subr.mxu0 0.0
    %51 = vmatpush1.msra.mxu0 0.0
    %52 = vmatprep.subr.mxu0 0.0
    %53 = vmatpush1.msra.mxu0 0.0
    %54 = vmatprep.subr.mxu0 0.0
    %55 = vmatpush1.msra.mxu0 0.0
    %56 = vmatprep.subr.mxu0 0.0
    %57 = vmatpush1.msra.mxu0 0.0
    %58 = vmatprep.subr.mxu0 0.0
    %59 = vmatpush1.msra.mxu0 0.0
    %60 = vmatprep.subr.mxu0 0.0
    %61 = vmatpush1.msra.mxu0 0.0
    %62 = vmatprep.subr.mxu0 0.0
    %63 = vmatpush1.msra.mxu0 0.0
    %64 = vmatprep.subr.mxu0 0.0
    %65 = vmatpush1.msra.mxu0 0.0
    %66 = vmatprep.subr.mxu0 0.0
    %67 = vmatpush1.msra.mxu0 0.0
    %68 = vmatprep.subr.mxu0 0.0
    %69 = vmatpush1.msra.mxu0 0.0
    %70 = vmatprep.subr.mxu0 0.0
    %71 = vmatpush1.msra.mxu0 0.0
    %72 = vmatprep.subr.mxu0 0.0
    %73 = vmatpush1.msra.mxu0 0.0
    %74 = vmatprep.subr.mxu0 0.0
    %75 = vmatpush1.msra.mxu0 0.0
    %76 = vmatprep.subr.mxu0 0.0
    %77 = vmatpush1.msra.mxu0 0.0
    %78 = vmatprep.subr.mxu0 0.0
    %79 = vmatpush1.msra.mxu0 0.0
    %80 = vmatprep.subr.mxu0 0.0
    %81 = vmatpush1.msra.mxu0 0.0
    %82 = vmatprep.subr.mxu0 0.0
    %83 = vmatpush1.msra.mxu0 0.0
    %84 = vmatprep.subr.mxu0 0.0
    %85 = vmatpush1.msra.mxu0 0.0
    %86 = vmatprep.subr.mxu0 0.0
    %87 = vmatpush1.msra.mxu0 0.0
    %88 = vmatprep.mubr.f32.mxu0 0.0
    %89 = vmatmul.mubr.f32.gmra.mrb[0].mxu0 %v22
    %v90 = vpop.f32.mrb[0].mxu0
    %v91 = vadd.f32 0.0, %v90
    %v92 = vpop.f32.mrb[0].mxu0
    %93 = vdwg.mxu0
    %vm94 = vcmask 130048
    %v95 = vsel %vm94, %v91, 0.0
    %v96 = vrot.slane %v95, 4
    %v97 = vadd.f32 %v95, %v96
    %v98 = vrot.slane %v97, 2
    %v99 = vadd.f32 %v97, %v98
    %v100 = vrot.slane %v99, 1
    %v101 = vadd.f32 %v99, %v100
    %v102 = vmul.f32 %v91, %v91
    %v103 = vsel %vm94, %v102, 0.0
    %v104 = vrot.slane %v103, 4
    %v105 = vadd.f32 %v103, %v104
    %v106 = vrot.slane %v105, 2
    %v107 = vadd.f32 %v105, %v106
    %v108 = vrot.slane %v107, 1
    %v109 = vadd.f32 %v107, %v108
    %v110 = vmul.f32 %v101, 0.125
    %v111 = vmul.f32 %v109, 0.125
    %v112 = vmul.f32 %v110, %v110
    %v113 = vsub.f32 %v111, %v112
    %v114 = vmax.f32 %v113, 0.0
    %v115 = vadd.f32 %v114, 1e-05
    %v116 = vrsqrt.pop %v115
    %v117 = vld [vmem:[%s2] sm:$0x1]
    %v118 = vld [vmem:[%s2 + $0x1] sm:$0x1]
    %v119 = vmul.f32 %v117, %v116
    %v120 = vmul.f32 %v110, %v119
    %v121 = vsub.f32 %v118, %v120
    %v122 = vlaneseq
    %v123 = vshrl.u32 %v122, 7
    %v124 = vsub.s32 0, %v123
    %v125 = vrot.slane %v119, %v124
    %v126 = vmul.f32 %v91, %v125
    %v127 = vlaneseq
    %v128 = vshrl.u32 %v127, 7
    %v129 = vsub.s32 0, %v128
    %v130 = vrot.slane %v121, %v129
    %v131 = vadd.f32 %v126, %v130
    %132 = vst.msk [vmem:[#allocation2] sm:$0xff] %vm94, %v131
    // Predicated region
    $region14: #{tpu_custom_call.1} parent=1 // pred_check
      _
    $region15: #{tpu_custom_call.1} parent=1 // pred_check_branch
      %134 = sbr.rel (0) target = $region17
    $region16: #{tpu_custom_call.1} parent=1 // pred_region
      %s136 = ssub.s32 128, 128
      %137 = vsyncadd [#allocation3], %s136
      %s139 = sshll.u32 [#allocation2], 4
      %s140 = int_to_ptr.vmem [resolvable:$true] %s139
      %142 = dma.vmem_to_hbm [thread:$0]  %s140, 128, %s3, [#allocation3]
    $region17: #{tpu_custom_call.1} parent=1 // pred_fallthru
      _
    // Predicated region
    $region18: #{tpu_custom_call.1} parent=1 // pred_check
      _
    $region19: #{tpu_custom_call.1} parent=1 // pred_check_branch
      %144 = sbr.rel (0) target = $region21
    $region20: #{tpu_custom_call.1} parent=1 // pred_region
      %145 = dma.done [#allocation3], 128
    $region21: #{tpu_custom_call.1} parent=1 // pred_fallthru
      _
    %146 = vsyncpa [#allocation3], 1

</llo_original>
